<compile_context>
chip_gen: v7x
topology: tpu7x:2x2x1
jax: 0.10.0
libtpu: 0.0.40
codegen_flags: <defaults>
</compile_context>

<pallas_src>
import math
import functools
from dataclasses import dataclass, field

import jax
import jax.numpy as jnp
from jax.experimental import pallas as pl
from jax.experimental.pallas import tpu as pltpu


# ----------------------------------------------------------------------------
# helpers
# ----------------------------------------------------------------------------
def _pick_tile(dim, target, aligns=(256, 128, 8)):
    """Largest divisor of `dim` <= target that is a multiple of one of `aligns`
    (preferring 256-alignment for the v6e/v7x MXU); falls back to the full dim."""
    if dim <= target:
        return dim
    for a in aligns:
        t = (min(target, dim) // a) * a
        while t >= a:
            if dim % t == 0:
                return t
            t -= a
    return dim


def _gelu_tanh(x):
    return 0.5 * x * (1.0 + jnp.tanh(math.sqrt(2.0 / math.pi) * (x + 0.044715 * x * x * x)))


def silu(x):
    return x * jax.nn.sigmoid(x)


# ----------------------------------------------------------------------------
# Linear kernel: bias + activation + residual/gate epilogue fused
# ----------------------------------------------------------------------------
def _linear_kernel(*refs, activation, fused):
    if fused:
        x_ref, w_ref, b_ref, r_ref, g_ref, o_ref, acc_ref = refs
    else:
        x_ref, w_ref, b_ref, o_ref, acc_ref = refs

    @pl.when(pl.program_id(2) == 0)
    def _():
        acc_ref[...] = jnp.zeros_like(acc_ref)

    acc_ref[...] += jnp.dot(x_ref[...], w_ref[...],
                            preferred_element_type=jnp.float32)

    @pl.when(pl.program_id(2) == pl.num_programs(2) - 1)
    def _():
        y = acc_ref[...] + b_ref[...].astype(jnp.float32)
        if activation == "gelu":
            y = _gelu_tanh(y)
        elif activation == "silu":
            y = y * jax.nn.sigmoid(y)
        if fused:
            y = r_ref[...].astype(jnp.float32) + g_ref[0].astype(jnp.float32) * y
        o_ref[...] = y.astype(o_ref.dtype)


def linear(x, w, b, activation=None, residual=None, gate=None, out_dtype=jnp.bfloat16):
    """y = act(x @ w + b); optionally y = residual + gate * y (fused epilogue).

    3-D token-level inputs use the tiled Pallas MXU kernel (bf16 in, f32 acc, bf16 out).
    2-D vec-level inputs (modulation / MLPEmbedder / adaLN, M == batch) go to XLA where
    the Pallas grid-step overhead would dwarf the work."""
    K = x.shape[-1]
    N = w.shape[-1]
    if x.ndim == 2:                                   # tiny vec-level matmul -> XLA
        y = jnp.dot(x.astype(jnp.float32), w.astype(jnp.float32),
                    preferred_element_type=jnp.float32) + b.astype(jnp.float32)
        if activation == "gelu":
            y = _gelu_tanh(y)
        elif activation == "silu":
            y = silu(y)
        return y

    B, L, _ = x.shape
    M = B * L
    tm = _pick_tile(L, 512, (256, 128, 8))            # tm divides L -> a tile never spans batches
    tn = _pick_tile(N, 1024, (256, 128, 8))
    tk = _pick_tile(K, 512, (256, 128, 8))
    blocks_per_batch = L // tm

    x2 = x.reshape(M, K).astype(jnp.bfloat16)
    b2 = b.reshape(1, N).astype(jnp.float32)
    in_specs = [
        pl.BlockSpec((tm, tk), lambda i, j, k: (i, k)),
        pl.BlockSpec((tk, tn), lambda i, j, k: (k, j)),
        pl.BlockSpec((1, tn), lambda i, j, k: (0, j)),
    ]
    args = [x2, w.astype(jnp.bfloat16), b2]
    fused = residual is not None
    if fused:
        in_specs += [
            pl.BlockSpec((tm, tn), lambda i, j, k: (i, j)),
            pl.BlockSpec((1, 1, tn), lambda i, j, k: (i // blocks_per_batch, 0, j)),
        ]
        args += [residual.reshape(M, N), gate.reshape(B, 1, N).astype(jnp.float32)]

    y = pl.pallas_call(
        functools.partial(_linear_kernel, activation=activation, fused=fused),
        out_shape=jax.ShapeDtypeStruct((M, N), out_dtype),
        grid=(M // tm, N // tn, K // tk),
        in_specs=in_specs,
        out_specs=pl.BlockSpec((tm, tn), lambda i, j, k: (i, j)),
        scratch_shapes=[pltpu.VMEM((tm, tn), jnp.float32)],
        compiler_params=pltpu.CompilerParams(
            dimension_semantics=("parallel", "parallel", "arbitrary")),
    )(*args)
    return y.reshape(B, L, N)


# ----------------------------------------------------------------------------
# LayerNorm (eps=1e-6, no affine) with fused (1+scale)*y+shift modulation
# ----------------------------------------------------------------------------
def _ln_mod_kernel(x_ref, sc_ref, sh_ref, o_ref):
    x = x_ref[...].astype(jnp.float32)
    mu = jnp.mean(x, axis=-1, keepdims=True)
    xc = x - mu
    var = jnp.mean(xc * xc, axis=-1, keepdims=True)
    y = xc * jax.lax.rsqrt(var + 1e-6)
    o_ref[...] = ((1.0 + sc_ref[...]) * y + sh_ref[...]).astype(o_ref.dtype)


def layernorm_mod(x, scale, shift):
    B, L, C = x.shape
    tm = _pick_tile(L, 256, (256, 128, 8))            # bf16 I/O -> fits v5e 16 MiB scoped VMEM
    return pl.pallas_call(
        _ln_mod_kernel,
        out_shape=jax.ShapeDtypeStruct((B, L, C), jnp.bfloat16),
        grid=(B, L // tm),
        in_specs=[
            pl.BlockSpec((1, tm, C), lambda b, i: (b, i, 0)),
            pl.BlockSpec((1, 1, C), lambda b, i: (b, 0, 0)),
            pl.BlockSpec((1, 1, C), lambda b, i: (b, 0, 0)),
        ],
        out_specs=pl.BlockSpec((1, tm, C), lambda b, i: (b, i, 0)),
        compiler_params=pltpu.CompilerParams(
            dimension_semantics=("parallel", "parallel")),
    )(x, scale.astype(jnp.float32), shift.astype(jnp.float32))


# ----------------------------------------------------------------------------
# Fused QK RMSNorm + RoPE + softmax-scale, reading straight from the qkv slab
# ----------------------------------------------------------------------------
def _rope_perm(D):
    # (D, D) signed pair-swap: (x @ P)[2i] = -x[2i+1], (x @ P)[2i+1] = +x[2i]
    c = jnp.arange(D)
    rows = jnp.where(c % 2 == 0, c + 1, c - 1)
    vals = jnp.where(c % 2 == 0, -1.0, 1.0).astype(jnp.float32)
    return jnp.zeros((D, D), jnp.float32).at[rows, c].set(vals)


def _qk_prep_kernel(qx_ref, kx_ref, cos_ref, sin_ref, qs_ref, ks_ref, p_ref,
                    qo_ref, ko_ref, *, sm_scale, eps):
    cos = cos_ref[0]
    sin = sin_ref[0]
    perm = p_ref[...]

    def norm_rope(x, s, out_scale):
        x = x.astype(jnp.float32)
        rrms = jax.lax.rsqrt(jnp.mean(x * x, axis=-1, keepdims=True) + eps)
        x = x * rrms * s
        x_rot = jnp.dot(x, perm, preferred_element_type=jnp.float32)
        return (cos * x + sin * x_rot) * out_scale

    qo_ref[0] = norm_rope(qx_ref[0], qs_ref[...], sm_scale).astype(qo_ref.dtype)
    ko_ref[0] = norm_rope(kx_ref[0], ks_ref[...], 1.0).astype(ko_ref.dtype)


def qk_norm_rope(qkv, cos, sin, q_scale, k_scale, num_heads, sm_scale):
    """RMSNorm(QKNorm) + RoPE + q-scale for Q and K, read per (batch, head, row-tile)
    directly out of the packed qkv / lin1 slab; writes (B, L, H*D) bf16 head-major."""
    B, L, _ = qkv.shape
    H = num_heads
    D = q_scale.shape[-1]
    tl = _pick_tile(L, 256, (256, 128, 8))
    perm = _rope_perm(D)
    spec_q = pl.BlockSpec((1, tl, D), lambda b, h, i: (b, i, h))
    spec_k = pl.BlockSpec((1, tl, D), lambda b, h, i: (b, i, H + h))
    spec_cs = pl.BlockSpec((1, tl, D), lambda b, h, i: (b, i, 0))
    spec_s = pl.BlockSpec((1, D), lambda b, h, i: (0, 0))
    spec_p = pl.BlockSpec((D, D), lambda b, h, i: (0, 0))
    spec_o = pl.BlockSpec((1, tl, D), lambda b, h, i: (b, i, h))
    return pl.pallas_call(
        functools.partial(_qk_prep_kernel, sm_scale=sm_scale, eps=1e-6),
        out_shape=(jax.ShapeDtypeStruct((B, L, H * D), jnp.bfloat16),
                   jax.ShapeDtypeStruct((B, L, H * D), jnp.bfloat16)),
        grid=(B, H, L // tl),
        in_specs=[spec_q, spec_k, spec_cs, spec_cs, spec_s, spec_s, spec_p],
        out_specs=(spec_o, spec_o),
        compiler_params=pltpu.CompilerParams(
            dimension_semantics=("parallel", "parallel", "parallel")),
    )(qkv, qkv, cos, sin,
      q_scale.reshape(1, D).astype(jnp.float32),
      k_scale.reshape(1, D).astype(jnp.float32), perm)


# ----------------------------------------------------------------------------
# Flash attention: output written directly in (B, L, H*D) layout
# ----------------------------------------------------------------------------
def _flash_kernel(q_ref, k_ref, v_ref, o_ref, m_sc, l_sc, acc_sc):
    @pl.when(pl.program_id(3) == 0)
    def _():
        m_sc[...] = jnp.full_like(m_sc, -jnp.inf)
        l_sc[...] = jnp.zeros_like(l_sc)
        acc_sc[...] = jnp.zeros_like(acc_sc)

    q = q_ref[0]                       # (tq, D) bf16, pre-scaled by 1/sqrt(D)
    k = k_ref[0]                       # (tk, D) bf16
    s = jax.lax.dot_general(q, k, (((1,), (1,)), ((), ())),
                            preferred_element_type=jnp.float32)
    m_prev = m_sc[...]
    m_new = jnp.maximum(m_prev, jnp.max(s, axis=-1, keepdims=True))
    alpha = jnp.exp(m_prev - m_new)
    p = jnp.exp(s - m_new)
    l_sc[...] = alpha * l_sc[...] + jnp.sum(p, axis=-1, keepdims=True)
    acc_sc[...] = alpha * acc_sc[...] + jnp.dot(
        p.astype(v_ref.dtype), v_ref[0], preferred_element_type=jnp.float32)
    m_sc[...] = m_new

    @pl.when(pl.program_id(3) == pl.num_programs(3) - 1)
    def _():
        # exact divide (runs once per (b,h,qi) tile) for parity with torch SDPA softmax
        o_ref[0] = (acc_sc[...] / l_sc[...]).astype(o_ref.dtype)


def flash_attention(q, k, v, num_heads, v_head_offset=0):
    """q, k: (B, L, H*D) bf16 head-major; V is read from `v` at head-block offset
    `v_head_offset` (lets V be consumed straight out of a packed qkv / lin1 slab).
    Output is (B, Lq, H*D) -- already the `B L (H D)` layout the projection expects."""
    B, Lq, HD = q.shape
    H = num_heads
    D = HD // H
    Lk = k.shape[1]
    tq = _pick_tile(Lq, 512 if Lq >= 2048 else 256, (256, 128, 8))
    tk = _pick_tile(Lk, 512, (256, 128, 8))
    voff = v_head_offset
    return pl.pallas_call(
        _flash_kernel,
        out_shape=jax.ShapeDtypeStruct((B, Lq, HD), jnp.bfloat16),
        grid=(B, H, Lq // tq, Lk // tk),
        in_specs=[
            pl.BlockSpec((1, tq, D), lambda b, h, qi, ki: (b, qi, h)),
            pl.BlockSpec((1, tk, D), lambda b, h, qi, ki: (b, ki, h)),
            pl.BlockSpec((1, tk, D), lambda b, h, qi, ki: (b, ki, voff + h)),
        ],
        out_specs=pl.BlockSpec((1, tq, D), lambda b, h, qi, ki: (b, qi, h)),
        scratch_shapes=[
            pltpu.VMEM((tq, 1), jnp.float32),
            pltpu.VMEM((tq, 1), jnp.float32),
            pltpu.VMEM((tq, D), jnp.float32),
        ],
        compiler_params=pltpu.CompilerParams(
            dimension_semantics=("parallel", "parallel", "parallel", "arbitrary")),
    )(q, k, v)


def fused_attention(segments, cos, sin, num_heads):
    """segments: list of (qkv_slab, q_scale, k_scale, seq_len) per stream, in order.
    Each slab is (B, L_i, >= 3*H*D) bf16 with Q/K/V packed head-major at offsets
    0, H*D, 2*H*D (the raw QKV / lin1 linear output).  Returns (B, sum L_i, H*D)."""
    H = num_heads
    D = segments[0][1].shape[-1]

    if D % 128 == 0:                                  # lane-aligned fused Pallas path
        sm_scale = 1.0 / math.sqrt(D)
        qs, ks, off = [], [], 0
        for slab, q_scale, k_scale, L_i in segments:
            qi, ki = qk_norm_rope(slab, cos[:, off:off + L_i], sin[:, off:off + L_i],
                                  q_scale, k_scale, H, sm_scale)
            qs.append(qi)
            ks.append(ki)
            off += L_i
        if len(segments) == 1:                        # V read straight from the slab
            return flash_attention(qs[0], ks[0], segments[0][0], H, v_head_offset=2 * H)
        q = jnp.concatenate(qs, axis=1)
        k = jnp.concatenate(ks, axis=1)
        v = jnp.concatenate([s[0][..., 2 * H * D:3 * H * D] for s in segments], axis=1)
        return flash_attention(q, k, v, H, v_head_offset=0)

    # TODO(synk): head_dim not a multiple of 128 -> head-block slicing of the packed
    # slab is not lane-aligned; fall back to a small pure-XLA attention.
    B = segments[0][0].shape[0]
    qs, ks, vs, off = [], [], [], 0
    for slab, q_scale, k_scale, L_i in segments:
        cs, sn = cos[:, off:off + L_i, None], sin[:, off:off + L_i, None]
        off += L_i
        qkv = slab[..., :3 * H * D].astype(jnp.float32).reshape(B, L_i, 3, H, D)
        q, k, v = qkv[:, :, 0], qkv[:, :, 1], qkv[:, :, 2]      # (B, L_i, H, D)

        def rms(x, s):
            return x * jax.lax.rsqrt(jnp.mean(x * x, -1, keepdims=True) + 1e-6) * s

        def rope_apply(x):
            xp = x.reshape(*x.shape[:-1], D // 2, 2)
            rot = jnp.stack([-xp[..., 1], xp[..., 0]], axis=-1).reshape(x.shape)
            return cs * x + sn * rot

        qs.append(rope_apply(rms(q, q_scale)) / math.sqrt(D))
        ks.append(rope_apply(rms(k, k_scale)))
        vs.append(v)
    q = jnp.concatenate(qs, 1)
    k = jnp.concatenate(ks, 1)
    v = jnp.concatenate(vs, 1)
    s = jnp.einsum("bqhd,bkhd->bhqk", q, k)
    o = jnp.einsum("bhqk,bkhd->bqhd", jax.nn.softmax(s, axis=-1), v)
    L = o.shape[1]
    return o.reshape(B, L, H * D).astype(jnp.bfloat16)


# ----------------------------------------------------------------------------
# Plain-JAX glue (positional embedding, tiny vec-level ops)
# ----------------------------------------------------------------------------
def timestep_embedding(t, dim, max_period=10000, time_factor=1000.0):
    t = time_factor * t
    half = dim // 2
    freqs = jnp.exp(-math.log(max_period) * jnp.arange(half, dtype=jnp.float32) / half)
    args = t[:, None].astype(jnp.float32) * freqs[None]
    return jnp.concatenate([jnp.cos(args), jnp.sin(args)], axis=-1)


def rope(pos, dim, theta):
    scale = jnp.arange(0, dim, 2, dtype=jnp.float32) / dim
    omega = 1.0 / (theta ** scale)
    out = jnp.einsum("...n,d->...nd", pos.astype(jnp.float32), omega)
    out = jnp.stack([jnp.cos(out), -jnp.sin(out), jnp.sin(out), jnp.cos(out)], axis=-1)
    return out.reshape(*out.shape[:-1], 2, 2)


def embed_nd(ids, axes_dim, theta):
    n_axes = ids.shape[-1]
    emb = jnp.concatenate(
        [rope(ids[..., i], axes_dim[i], theta) for i in range(n_axes)], axis=-3)
    return emb[:, None]                               # (B, 1, L, D/2, 2, 2)


def pe_to_cos_sin(pe):
    """Expand the Flux pe tensor to per-lane cos/sin tables of shape (B, L, D)."""
    cos_p = pe[:, 0, :, :, 0, 0]                      # (B, L, D/2)
    sin_p = pe[:, 0, :, :, 1, 0]
    cos = jnp.repeat(cos_p, 2, axis=-1).astype(jnp.float32)
    sin = jnp.repeat(sin_p, 2, axis=-1).astype(jnp.float32)
    return cos, sin


def mlp_embedder(p, x):
    h = linear(x, p["in"]["w"], p["in"]["b"], activation="silu")
    return linear(h, p["out"]["w"], p["out"]["b"])


def modulation(p, vec, double):
    out = linear(silu(vec), p["w"], p["b"])[:, None, :]
    return jnp.split(out, 6 if double else 3, axis=-1)  # each (B, 1, C)


def gelu_tanh(x):
    return _gelu_tanh(x)


# ----------------------------------------------------------------------------
# Blocks
# ----------------------------------------------------------------------------
def double_block(p, img, txt, vec, cos, sin, num_heads):
    L_txt = txt.shape[1]
    L_img = img.shape[1]

    i_sh1, i_sc1, i_g1, i_sh2, i_sc2, i_g2 = modulation(p["img_mod"], vec, True)
    t_sh1, t_sc1, t_g1, t_sh2, t_sc2, t_g2 = modulation(p["txt_mod"], vec, True)

    img_qkv = linear(layernorm_mod(img, i_sc1, i_sh1),
                     p["img_qkv"]["w"], p["img_qkv"]["b"])
    txt_qkv = linear(layernorm_mod(txt, t_sc1, t_sh1),
                     p["txt_qkv"]["w"], p["txt_qkv"]["b"])

    attn = fused_attention(
        [(txt_qkv, p["txt_qnorm"], p["txt_knorm"], L_txt),
         (img_qkv, p["img_qnorm"], p["img_knorm"], L_img)],
        cos, sin, num_heads)
    txt_attn, img_attn = attn[:, :L_txt], attn[:, L_txt:]

    img = linear(img_attn, p["img_proj"]["w"], p["img_proj"]["b"],
                 residual=img, gate=i_g1)
    h = layernorm_mod(img, i_sc2, i_sh2)
    h = linear(h, p["img_mlp0"]["w"], p["img_mlp0"]["b"], activation="gelu")
    img = linear(h, p["img_mlp1"]["w"], p["img_mlp1"]["b"], residual=img, gate=i_g2)

    txt = linear(txt_attn, p["txt_proj"]["w"], p["txt_proj"]["b"],
                 residual=txt, gate=t_g1)
    h = layernorm_mod(txt, t_sc2, t_sh2)
    h = linear(h, p["txt_mlp0"]["w"], p["txt_mlp0"]["b"], activation="gelu")
    txt = linear(h, p["txt_mlp1"]["w"], p["txt_mlp1"]["b"], residual=txt, gate=t_g2)
    return img, txt


def single_block(p, x, vec, cos, sin, num_heads, hidden_size):
    m_shift, m_scale, m_gate = modulation(p["mod"], vec, False)
    x_mod = layernorm_mod(x, m_scale, m_shift)
    lin1 = linear(x_mod, p["lin1"]["w"], p["lin1"]["b"])        # (B, L, 3*C + mlp)
    attn = fused_attention([(lin1, p["qnorm"], p["knorm"], x.shape[1])],
                           cos, sin, num_heads)
    # gelu applies only to the MLP slice of lin1 -> stays in JAX (XLA fuses it).
    mlp_h = gelu_tanh(lin1[..., 3 * hidden_size:].astype(jnp.float32)).astype(jnp.bfloat16)
    out_in = jnp.concatenate([attn, mlp_h], axis=-1)
    return linear(out_in, p["lin2"]["w"], p["lin2"]["b"], residual=x, gate=m_gate)


def last_layer(p, x, vec):
    mod = linear(silu(vec), p["ada"]["w"], p["ada"]["b"])       # XLA (tiny M)
    shift, scale = jnp.split(mod, 2, axis=1)
    x = layernorm_mod(x, scale[:, None, :], shift[:, None, :])
    return linear(x, p["lin"]["w"], p["lin"]["b"], out_dtype=jnp.float32)


# ----------------------------------------------------------------------------
# Flux_kv model
# ----------------------------------------------------------------------------
@dataclass
class FluxParams:
    in_channels: int
    vec_in_dim: int
    context_in_dim: int
    hidden_size: int
    mlp_ratio: float
    num_heads: int
    depth: int
    depth_single_blocks: int
    axes_dim: list = field(default_factory=list)
    theta: int = 10000
    qkv_bias: bool = True
    guidance_embed: bool = False


def init_params(key, cfg: FluxParams):
    keys = iter(jax.random.split(key, 512))

    def lin(in_d, out_d):
        kw, kb = jax.random.split(next(keys))
        return {
            # weights stored bf16 once (MXU inputs); biases / norm scales stay f32
            "w": (jax.random.normal(kw, (in_d, out_d), jnp.float32) * 0.02
                  ).astype(jnp.bfloat16),
            "b": jax.random.normal(kb, (out_d,), jnp.float32) * 0.02,
        }

    H = cfg.hidden_size
    mlp_h = int(H * cfg.mlp_ratio)
    hd = H // cfg.num_heads
    ones = lambda: jnp.ones((hd,), jnp.float32)

    p = {
        "img_in": lin(cfg.in_channels, H),
        "txt_in": lin(cfg.context_in_dim, H),
        "time_in": {"in": lin(256, H), "out": lin(H, H)},
        "vector_in": {"in": lin(cfg.vec_in_dim, H), "out": lin(H, H)},
        "double": [],
        "single": [],
        "final": {"ada": lin(H, 2 * H), "lin": lin(H, cfg.in_channels)},
    }
    if cfg.guidance_embed:
        p["guidance_in"] = {"in": lin(256, H), "out": lin(H, H)}
    for _ in range(cfg.depth):
        p["double"].append({
            "img_mod": lin(H, 6 * H), "txt_mod": lin(H, 6 * H),
            "img_qkv": lin(H, 3 * H), "txt_qkv": lin(H, 3 * H),
            "img_qnorm": ones(), "img_knorm": ones(),
            "txt_qnorm": ones(), "txt_knorm": ones(),
            "img_proj": lin(H, H), "txt_proj": lin(H, H),
            "img_mlp0": lin(H, mlp_h), "img_mlp1": lin(mlp_h, H),
            "txt_mlp0": lin(H, mlp_h), "txt_mlp1": lin(mlp_h, H),
        })
    for _ in range(cfg.depth_single_blocks):
        p["single"].append({
            "mod": lin(H, 3 * H),
            "lin1": lin(H, 3 * H + mlp_h),
            "lin2": lin(H + mlp_h, H),
            "qnorm": ones(), "knorm": ones(),
        })
    return p


def flux_kv_forward(p, cfg: FluxParams, img, img_ids, txt, txt_ids, timesteps, y,
                    guidance=None, info=None, info_s=None, zt_r=None, inp_target_s=None):
    if img.ndim != 3 or txt.ndim != 3:
        raise ValueError("Input img and txt tensors must have 3 dimensions.")
    info = dict(info or {})

    img = linear(img, p["img_in"]["w"], p["img_in"]["b"])
    vec = mlp_embedder(p["time_in"], timestep_embedding(timesteps, 256))
    if cfg.guidance_embed:
        if guidance is None:
            raise ValueError("Didn't get guidance strength for guidance distilled model.")
        vec = vec + mlp_embedder(p["guidance_in"], timestep_embedding(guidance, 256))
    vec = vec + mlp_embedder(p["vector_in"], y)
    txt = linear(txt, p["txt_in"]["w"], p["txt_in"]["b"])

    ids = jnp.concatenate([txt_ids, img_ids], axis=1)
    pe = embed_nd(ids, cfg.axes_dim, cfg.theta)
    cos, sin = pe_to_cos_sin(pe)

    if not info.get("inverse", True):
        zt_r = linear(zt_r, p["img_in"]["w"], p["img_in"]["b"])
        mask_indices = info["mask_indices"]
        info["pe_mask"] = jnp.concatenate(
            [pe[:, :, :512], pe[:, :, mask_indices + 512]], axis=2)
        # TODO(synk): the *_kv blocks consume pe_mask / zt_r for kv-cache feature
        # injection; their source is not provided, so only the standard path is run.

    for cnt, bp in enumerate(p["double"]):
        info["id"] = cnt
        img, txt = double_block(bp, img, txt, vec, cos, sin, cfg.num_heads)

    x = jnp.concatenate([txt, img], axis=1)
    for cnt, bp in enumerate(p["single"]):
        info["id"] = cnt
        x = single_block(bp, x, vec, cos, sin, cfg.num_heads, cfg.hidden_size)

    img = x[:, txt.shape[1]:, ...]
    return last_layer(p["final"], img, vec)


# ----------------------------------------------------------------------------
# Demo
# ----------------------------------------------------------------------------
if __name__ == "__main__":
    # head_dim = hidden_size // num_heads = 128 so the fused slab-slicing BlockSpecs
    # stay 128-lane aligned (same head_dim as the real Flux model).
    cfg = FluxParams(
        in_channels=4,
        vec_in_dim=8,
        context_in_dim=8,
        hidden_size=256,
        mlp_ratio=2.0,
        num_heads=2,
        depth=1,
        depth_single_blocks=1,
        axes_dim=[32, 32, 64],        # sum == hidden_size // num_heads == 128
        theta=10000,
        qkv_bias=True,
        guidance_embed=False,
    )

    key = jax.random.PRNGKey(0)
    k_param, k_img, k_txt, k_t, k_y = jax.random.split(key, 5)

    B, L_img, L_txt = 2, 8, 8
    params = init_params(k_param, cfg)

    img = jax.random.normal(k_img, (B, L_img, cfg.in_channels), jnp.float32)
    txt = jax.random.normal(k_txt, (B, L_txt, cfg.context_in_dim), jnp.float32)
    timesteps = jax.random.uniform(k_t, (B,), jnp.float32)
    y = jax.random.normal(k_y, (B, cfg.vec_in_dim), jnp.float32)

    img_ids = jnp.tile(
        jnp.stack(
            [jnp.zeros((L_img,)), jnp.arange(L_img, dtype=jnp.float32),
             jnp.arange(L_img, dtype=jnp.float32)], axis=-1
        )[None], (B, 1, 1))
    txt_ids = jnp.zeros((B, L_txt, 3), jnp.float32)

    info = {"inverse": True}          # standard (kv-caching / inversion) path

    out = flux_kv_forward(params, cfg, img, img_ids, txt, txt_ids, timesteps, y,
                          guidance=None, info=info, info_s={}, zt_r=None, inp_target_s={})
    out = jax.block_until_ready(out)
    assert out.shape == (B, L_img, cfg.in_channels), out.shape
    assert bool(jnp.all(jnp.isfinite(out)))
    print("KERNEL_OK")
</pallas_src>

<mosaic_0001>
module attributes {stable_mosaic.version = 11 : i64} {
  func.func @_linear_kernel(%arg0: i32, %arg1: i32, %arg2: i32, %arg3: memref<8x4xbf16, #tpu.memory_space<vmem>>, %arg4: memref<4x256xbf16, #tpu.memory_space<vmem>>, %arg5: memref<1x256xf32, #tpu.memory_space<vmem>>, %arg6: memref<8x256xbf16, #tpu.memory_space<vmem>>, %arg7: memref<8x256xf32, #tpu.memory_space<vmem>>) attributes {dimension_semantics = [#tpu.dimension_semantics<parallel>, #tpu.dimension_semantics<parallel>, #tpu.dimension_semantics<arbitrary>], iteration_bounds = array<i64: 2, 1, 1>, scalar_prefetch = 0 : i64, scratch_operands = 1 : i64, tpu.core_type = #tpu.core_type<tc>, window_params = [{transform_indices = @transform_0, window_bounds = array<i64: 8, 4>}, {transform_indices = @transform_1, window_bounds = array<i64: 4, 256>}, {transform_indices = @transform_2, window_bounds = array<i64: 1, 256>}, {transform_indices = @transform_3, window_bounds = array<i64: 8, 256>}]} {
    %c0_i32 = arith.constant 0 : i32
    %0 = arith.cmpi eq, %arg2, %c0_i32 : i32
    %1 = arith.extui %0 : i1 to i32
    %c0_i32_0 = arith.constant 0 : i32
    %2 = arith.cmpi ne, %1, %c0_i32_0 : i32
    scf.if %2 {
      %cst_10 = arith.constant 0.000000e+00 : f32
      %12 = vector.broadcast %cst_10 : f32 to vector<8x256xf32>
      %c0_11 = arith.constant 0 : index
      %c0_12 = arith.constant 0 : index
      %13 = vector.load %arg7[%c0_11, %c0_12] : memref<8x256xf32, #tpu.memory_space<vmem>>, vector<8x256xf32>
      tpu.vector_store %arg7[%c0_11, %c0_12], %12 {strides = array<i32>} : memref<8x256xf32, #tpu.memory_space<vmem>>, vector<8x256xf32>,
    } else {
    }
    %c0 = arith.constant 0 : index
    %c0_1 = arith.constant 0 : index
    %3 = vector.load %arg7[%c0, %c0_1] : memref<8x256xf32, #tpu.memory_space<vmem>>, vector<8x256xf32>
    %c0_2 = arith.constant 0 : index
    %c0_3 = arith.constant 0 : index
    %4 = vector.load %arg3[%c0_2, %c0_3] : memref<8x4xbf16, #tpu.memory_space<vmem>>, vector<8x4xbf16>
    %c0_4 = arith.constant 0 : index
    %c0_5 = arith.constant 0 : index
    %5 = vector.load %arg4[%c0_4, %c0_5] : memref<4x256xbf16, #tpu.memory_space<vmem>>, vector<4x256xbf16>
    %cst = arith.constant dense<0.000000e+00> : vector<8x256xf32>
    %6 = tpu.matmul %4, %5, %cst {dimension_numbers = #tpu.dot_dimension_numbers<[1], [0], [0], [1], [0, 0, 1, 1], [], []>} : vector<8x4xbf16>, vector<4x256xbf16>, vector<8x256xf32> -> vector<8x256xf32>
    %7 = arith.addf %3, %6 : vector<8x256xf32>
    %c0_6 = arith.constant 0 : index
    %c0_7 = arith.constant 0 : index
    %8 = vector.load %arg7[%c0_6, %c0_7] : memref<8x256xf32, #tpu.memory_space<vmem>>, vector<8x256xf32>
    tpu.vector_store %arg7[%c0_6, %c0_7], %7 {strides = array<i32>} : memref<8x256xf32, #tpu.memory_space<vmem>>, vector<8x256xf32>,
    %c0_i32_8 = arith.constant 0 : i32
    %9 = arith.cmpi eq, %arg2, %c0_i32_8 : i32
    %10 = arith.extui %9 : i1 to i32
    %c0_i32_9 = arith.constant 0 : i32
    %11 = arith.cmpi ne, %10, %c0_i32_9 : i32
    scf.if %11 {
      %c0_10 = arith.constant 0 : index
      %c0_11 = arith.constant 0 : index
      %12 = vector.load %arg7[%c0_10, %c0_11] : memref<8x256xf32, #tpu.memory_space<vmem>>, vector<8x256xf32>
      %c0_12 = arith.constant 0 : index
      %c0_13 = arith.constant 0 : index
      %13 = vector.load %arg5[%c0_12, %c0_13] : memref<1x256xf32, #tpu.memory_space<vmem>>, vector<1x256xf32>
      %14 = vector.broadcast %13 : vector<1x256xf32> to vector<8x256xf32>
      %15 = arith.addf %12, %14 : vector<8x256xf32>
      %16 = arith.truncf %15 : vector<8x256xf32> to vector<8x256xbf16>
      %c0_14 = arith.constant 0 : index
      %c0_15 = arith.constant 0 : index
      %17 = vector.load %arg6[%c0_14, %c0_15] : memref<8x256xbf16, #tpu.memory_space<vmem>>, vector<8x256xbf16>
      tpu.vector_store %arg6[%c0_14, %c0_15], %16 {strides = array<i32>} : memref<8x256xbf16, #tpu.memory_space<vmem>>, vector<8x256xbf16>,
    } else {
    }
    return
  }
  func.func @transform_0(%arg0: i32, %arg1: i32, %arg2: i32) -> (i32, i32) {
    %c0_i32 = arith.constant 0 : i32
    return %arg0, %arg2 : i32, i32
  }
  func.func @transform_1(%arg0: i32, %arg1: i32, %arg2: i32) -> (i32, i32) {
    %c0_i32 = arith.constant 0 : i32
    return %arg2, %arg1 : i32, i32
  }
  func.func @transform_2(%arg0: i32, %arg1: i32, %arg2: i32) -> (i32, i32) {
    %c0_i32 = arith.constant 0 : i32
    %c0_i32_0 = arith.constant 0 : i32
    return %c0_i32, %arg1 : i32, i32
  }
  func.func @transform_3(%arg0: i32, %arg1: i32, %arg2: i32) -> (i32, i32) {
    %c0_i32 = arith.constant 0 : i32
    return %arg0, %arg1 : i32, i32
  }
}

</mosaic_0001>

<llo_original>
// kernel: tpu_custom_call.1
$region0: #{tpu_custom_call.1}
  #allocation0 [shape = 'u32[]', space=smem, size = 0x4, offset = 0x4, fixed_abs, tag = 'smem constant byte address 0x4 - core index']
  #allocation1 [shape = 'u32[144,128]{1,0:T(1,128)}', space=vmem, size = 0x12000, scoped, tag = 'internal scratch']
  #allocation2 [shape = 'f32[8,256]{1,0:T(8,128)}', space=vmem, size = 0x2000, scoped, tag = 'scratch operand']
  %s0 = inlined_call_operand.vmem [shape: bf16[16,4], index: 0, kind: input, shape index: {}]
  %s1 = inlined_call_operand.vmem [shape: bf16[4,256], index: 1, kind: input, shape index: {}]
  %s2 = inlined_call_operand.vmem [shape: f32[1,256], index: 2, kind: input, shape index: {}]
  %s3 = inlined_call_operand.hbm [shape: bf16[16,256], index: 3, kind: output, shape index: {}]
  %s4 = sld [smem:[#allocation0]]
  $region53: #{tpu_custom_call.1} parent=0
    _
  %s6 = ssub.s32 1, %s4
  %s7 = scalar_select 0, %s6, %s4
  $region1: #{tpu_custom_call.1} parent=0
    #allocation3 [shape = 'u8[8192]{0}', space=vmem, size = 0x2000, scoped, tag = 'output window, operand 0']
    #allocation4 [shape = 's32[2]{0}', space=sflag, size = 0x8, scoped, tag = 'scoped memory for tpu_custom_call.1']
    %8 = vsyncpa [#allocation4], 0
    %s9 = scalar_lea.sflag [#allocation4], 1
    %10 = vsyncpa %s9, 0
    loop: start=0, step=1, limit=4
    $region2: #{tpu_custom_call.1} parent=1 // loop_pre_header
      _
    $region3: #{tpu_custom_call.1} parent=1 // loop_header
      %s12 = sphi 0, %s16
      %p13 = scmp.ge.s32.totalorder %s12, 4
      %s19 = sphi 0, %s38
      %s20 = sphi 0, %s34
      %s21 = sphi 0, %s30
      %s22 = sphi 0, %s19
      %s23 = sphi 0, %s20
      %s24 = sphi 0, %s21
      %s25 = sphi 0, %s22
      %s26 = sphi 0, %s23
      %s27 = sphi 0, %s24
      %s43 = sphi 0, %s45
      %s46 = sphi 0, %s43
      %s47 = sphi 0, %s46
      %s63 = sphi 0, %s47
      %s71 = sphi 0, %s73
      %s74 = sphi 0, %s71
      %s75 = sphi 0, %s74
      %s91 = sphi 0, %s75
      %s97 = sphi 0, %s99
      %s100 = sphi 0, %s97
      %s101 = sphi 0, %s100
      %s117 = sphi 0, %s101
      %s125 = sphi 0, %s127
      %s128 = sphi 0, %s125
      %s129 = sphi 0, %s128
      %s145 = sphi 0, %s129
    $region4: #{tpu_custom_call.1} parent=1 // loop_header_branch
      %15 = sbr.rel (%p13) target = $region8
    $region5: #{tpu_custom_call.1} parent=1 // loop_body
      %s17 = ssub.s32 %s12, 1
      %s18 = ssub.s32 %s12, 2
      %s28 = sadd.s32 1, %s21
      %p29 = scmp.ge.s32.totalorder %s28, 1
      %s30 = scalar_select %p29, 0, %s28
      %s31 = sadd.s32 1, %s20
      %s32 = scalar_select %p29, %s31, %s20
      %p33 = scmp.ge.s32.totalorder %s32, 1
      %s34 = scalar_select %p33, 0, %s32
      %s35 = sadd.s32 1, %s19
      %s36 = scalar_select %p33, %s35, %s19
      %p37 = scmp.ge.s32.totalorder %s36, 2
      %s38 = scalar_select %p37, 0, %s36
      %s39 = ssub.s32 %s19, %s38
      %s40 = ssub.s32 %s21, %s30
      %s41 = sor.u32 %s39, %s40
      %p42 = scmp.eq.s32.totalorder %s41, 0
      %s44 = sadd.s32 %s43, 1
      %s45 = scalar_select %p42, %s43, %s44
      %p48 = pneg %p42
      %p49 = scmp.eq.s32.totalorder %s12, 1
      %p50 = por %p48, %p49
      %p51 = scmp.ne.s32.totalorder %s43, %s46
      %p52 = scmp.eq.s32.totalorder %s12, 0
      %p53 = por %p51, %p52
      %p54 = scmp.ne.s32.totalorder %s43, %s46
      %p55 = scmp.eq.s32.totalorder %s17, 1
      %p56 = por %p54, %p55
      %p57 = scmp.ne.s32.totalorder %s46, %s47
      %p58 = scmp.eq.s32.totalorder %s17, 0
      %p59 = por %p57, %p58
      %p60 = scmp.ne.s32.totalorder %s46, %s47
      %p61 = scmp.eq.s32.totalorder %s18, 1
      %p62 = por %p60, %p61
      %p64 = scmp.ne.s32.totalorder %s47, %s63
      %p65 = scmp.eq.s32.totalorder %s18, 0
      %p66 = por %p64, %p65
      %s67 = ssub.s32 %s21, %s30
      %s68 = ssub.s32 %s20, %s34
      %s69 = sor.u32 %s67, %s68
      %p70 = scmp.eq.s32.totalorder %s69, 0
      %s72 = sadd.s32 %s71, 1
      %s73 = scalar_select %p70, %s71, %s72
      %p76 = pneg %p70
      %p77 = scmp.eq.s32.totalorder %s12, 1
      %p78 = por %p76, %p77
      %p79 = scmp.ne.s32.totalorder %s71, %s74
      %p80 = scmp.eq.s32.totalorder %s12, 0
      %p81 = por %p79, %p80
      %p82 = scmp.ne.s32.totalorder %s71, %s74
      %p83 = scmp.eq.s32.totalorder %s17, 1
      %p84 = por %p82, %p83
      %p85 = scmp.ne.s32.totalorder %s74, %s75
      %p86 = scmp.eq.s32.totalorder %s17, 0
      %p87 = por %p85, %p86
      %p88 = scmp.ne.s32.totalorder %s74, %s75
      %p89 = scmp.eq.s32.totalorder %s18, 1
      %p90 = por %p88, %p89
      %p92 = scmp.ne.s32.totalorder %s75, %s91
      %p93 = scmp.eq.s32.totalorder %s18, 0
      %p94 = por %p92, %p93
      %s95 = ssub.s32 %s20, %s34
      %p96 = scmp.eq.s32.totalorder %s95, 0
      %s98 = sadd.s32 %s97, 1
      %s99 = scalar_select %p96, %s97, %s98
      %p102 = pneg %p96
      %p103 = scmp.eq.s32.totalorder %s12, 1
      %p104 = por %p102, %p103
      %p105 = scmp.ne.s32.totalorder %s97, %s100
      %p106 = scmp.eq.s32.totalorder %s12, 0
      %p107 = por %p105, %p106
      %p108 = scmp.ne.s32.totalorder %s97, %s100
      %p109 = scmp.eq.s32.totalorder %s17, 1
      %p110 = por %p108, %p109
      %p111 = scmp.ne.s32.totalorder %s100, %s101
      %p112 = scmp.eq.s32.totalorder %s17, 0
      %p113 = por %p111, %p112
      %p114 = scmp.ne.s32.totalorder %s100, %s101
      %p115 = scmp.eq.s32.totalorder %s18, 1
      %p116 = por %p114, %p115
      %p118 = scmp.ne.s32.totalorder %s101, %s117
      %p119 = scmp.eq.s32.totalorder %s18, 0
      %p120 = por %p118, %p119
      %s121 = ssub.s32 %s19, %s38
      %s122 = ssub.s32 %s20, %s34
      %s123 = sor.u32 %s121, %s122
      %p124 = scmp.eq.s32.totalorder %s123, 0
      %s126 = sadd.s32 %s125, 1
      %s127 = scalar_select %p124, %s125, %s126
      %p130 = pneg %p124
      %p131 = scmp.eq.s32.totalorder %s12, 1
      %p132 = por %p130, %p131
      %p133 = scmp.ne.s32.totalorder %s125, %s128
      %p134 = scmp.eq.s32.totalorder %s12, 0
      %p135 = por %p133, %p134
      %p136 = scmp.ne.s32.totalorder %s125, %s128
      %p137 = scmp.eq.s32.totalorder %s17, 1
      %p138 = por %p136, %p137
      %p139 = scmp.ne.s32.totalorder %s128, %s129
      %p140 = scmp.eq.s32.totalorder %s17, 0
      %p141 = por %p139, %p140
      %p142 = scmp.ne.s32.totalorder %s128, %s129
      %p143 = scmp.eq.s32.totalorder %s18, 1
      %p144 = por %p142, %p143
      %p146 = scmp.ne.s32.totalorder %s129, %s145
      %p147 = scmp.eq.s32.totalorder %s18, 0
      %p148 = por %p146, %p147
      %p149 = scmp.le.s32.totalorder 1, %s12
      %p150 = scmp.lt.s32.totalorder %s12, 3
      %p151 = pnand %p149, %p150
      %p152 = pneg %p151
      // Predicated region
      $region9: #{tpu_custom_call.1} parent=5 // pred_check
        _
      $region10: #{tpu_custom_call.1} parent=5 // pred_check_branch
        %154 = sbr.rel (%p151) target = $region12
      $region11: #{tpu_custom_call.1} parent=5 // pred_region
        %s155 = ssub.s32 %s12, 1
        // Predicated region
        $region13: #{tpu_custom_call.1} parent=11 // pred_check
          %p156 = pneg %p87
        $region14: #{tpu_custom_call.1} parent=11 // pred_check_branch
          %158 = sbr.rel (%p156) target = $region16
        $region15: #{tpu_custom_call.1} parent=11 // pred_region
          %s159 = smul.u32 2, %s23
          %p160 = scmp.lt.s32.totalorder %s24, 0
          %s161 = scalar_select %p160, %s24, 0
          %p162 = scmp.lt.s32.totalorder %s159, 1
          %s163 = scalar_select %p162, %s159, 1
          %s164 = smul.addr %s161, 2
          %s165 = sadd.s32 %s163, %s164
          %s166 = smul.addr %s165, 2
          %s167 = scalar_lea.vmem %s1, %s166
          %s168 = smul.u32 2, %s23
        $region16: #{tpu_custom_call.1} parent=11 // pred_fallthru
          _
        // Predicated region
        $region17: #{tpu_custom_call.1} parent=11 // pred_check
          %p169 = pneg %p113
        $region18: #{tpu_custom_call.1} parent=11 // pred_check_branch
          %171 = sbr.rel (%p169) target = $region20
        $region19: #{tpu_custom_call.1} parent=11 // pred_region
          %s172 = smul.u32 2, %s23
          %p173 = scmp.lt.s32.totalorder %s172, 1
          %s174 = scalar_select %p173, %s172, 1
          %s175 = scalar_lea.vmem %s2, %s174
          %s176 = smul.u32 2, %s23
        $region20: #{tpu_custom_call.1} parent=11 // pred_fallthru
          _
      $region12: #{tpu_custom_call.1} parent=5 // pred_fallthru
        _
      %p177 = scmp.lt.s32.totalorder %s12, 2
      // Predicated region
      $region21: #{tpu_custom_call.1} parent=5 // pred_check
        %p178 = pneg %p177
      $region22: #{tpu_custom_call.1} parent=5 // pred_check_branch
        %180 = sbr.rel (%p178) target = $region24
      $region23: #{tpu_custom_call.1} parent=5 // pred_region
        // Predicated region
        $region25: #{tpu_custom_call.1} parent=23 // pred_check
          %p181 = pneg %p53
        $region26: #{tpu_custom_call.1} parent=23 // pred_check_branch
          %183 = sbr.rel (%p181) target = $region28
        $region27: #{tpu_custom_call.1} parent=23 // pred_region
          %p184 = scmp.lt.s32.totalorder %s19, 1
          %s185 = scalar_select %p184, %s19, 1
          %p186 = scmp.lt.s32.totalorder %s21, 0
          %s187 = scalar_select %p186, %s21, 0
          %s188 = sadd.s32 %s187, %s185
          %s189 = smul.addr %s188, 4
          %s190 = scalar_lea.vmem %s0, %s189
        $region28: #{tpu_custom_call.1} parent=23 // pred_fallthru
          _
      $region24: #{tpu_custom_call.1} parent=5 // pred_fallthru
        _
      %p191 = scmp.le.s32.totalorder 1, %s12
      %p192 = scmp.lt.s32.totalorder %s12, 3
      %p193 = pnand %p191, %p192
      %p194 = pneg %p193
      // Predicated region
      $region29: #{tpu_custom_call.1} parent=5 // pred_check
        _
      $region30: #{tpu_custom_call.1} parent=5 // pred_check_branch
        %196 = sbr.rel (%p193) target = $region32
      $region31: #{tpu_custom_call.1} parent=5 // pred_region
        %s197 = ssub.s32 %s12, 1
        %p198 = scmp.lt.s32.totalorder %s22, 1
        %s199 = scalar_select %p198, %s22, 1
        %p200 = scmp.lt.s32.totalorder %s24, 0
        %s201 = scalar_select %p200, %s24, 0
        %s202 = sadd.s32 %s201, %s199
        %s203 = smul.addr %s202, 4
        %s204 = scalar_lea.vmem %s0, %s203
        %p205 = pneg %p59
        %p206 = pneg %p56
        %s207 = smul.u32 2, %s23
        %p208 = scmp.lt.s32.totalorder %s24, 0
        %s209 = scalar_select %p208, %s24, 0
        %p210 = scmp.lt.s32.totalorder %s207, 1
        %s211 = scalar_select %p210, %s207, 1
        %s212 = smul.addr %s209, 2
        %s213 = sadd.s32 %s211, %s212
        %s214 = smul.addr %s213, 2
        %s215 = scalar_lea.vmem %s1, %s214
        %p216 = pneg %p87
        %p217 = pneg %p84
        %s218 = smul.u32 2, %s23
        %p219 = scmp.lt.s32.totalorder %s218, 1
        %s220 = scalar_select %p219, %s218, 1
        %s221 = scalar_lea.vmem %s2, %s220
        %p222 = pneg %p113
        %p223 = pneg %p110
        %p224 = pneg %p141
        %p225 = pneg %p138
        %s226 = sand.u32 %s128, 1
        %s227 = scalar_lea.sflag [#allocation4], %s226
        %s228 = sand.u32 %s128, 1
        %s229 = smul.addr %s228, 8
        %s230 = scalar_lea.vmem [#allocation3], %s229
        %p231 = scmp.lt.s32.totalorder %s22, 1
        %s232 = scalar_select %p231, %s22, 1
        %p233 = scmp.lt.s32.totalorder %s24, 0
        %s234 = scalar_select %p233, %s24, 0
        %s235 = sadd.s32 %s234, %s232
        %s236 = smul.addr %s235, 4
        %s237 = scalar_lea.vmem %s0, %s236
        %s238 = smul.u32 2, %s23
        %p239 = scmp.lt.s32.totalorder %s24, 0
        %s240 = scalar_select %p239, %s24, 0
        %p241 = scmp.lt.s32.totalorder %s238, 1
        %s242 = scalar_select %p241, %s238, 1
        %s243 = smul.addr %s240, 2
        %s244 = sadd.s32 %s242, %s243
        %s245 = smul.addr %s244, 2
        %s246 = scalar_lea.vmem %s1, %s245
        %s247 = smul.u32 2, %s23
        %s248 = smul.u32 2, %s23
        %p249 = scmp.lt.s32.totalorder %s248, 1
        %s250 = scalar_select %p249, %s248, 1
        %s251 = scalar_lea.vmem %s2, %s250
        %s252 = smul.u32 2, %s23
        %s253 = smul.u32 2, %s23
        %p255 = scmp.eq.s32.totalorder %s24, 0
        // Predicated region
        $region33: #{tpu_custom_call.1} parent=31 // pred_check
          %p256 = pneg %p255
        $region34: #{tpu_custom_call.1} parent=31 // pred_check_branch
          %258 = sbr.rel (%p256) target = $region36
        $region35: #{tpu_custom_call.1} parent=31 // pred_region
          %259 = vst [vmem:[#allocation2] sm:$0xff] 0.0
          %260 = vst [vmem:[#allocation2 + $0x8] sm:$0xff] 0.0
        $region36: #{tpu_custom_call.1} parent=31 // pred_fallthru
          _
        %v261 = vld [vmem:[#allocation2] sm:$0xff]
        %v262 = vld [vmem:[#allocation2 + $0x8] sm:$0xff]
        %v263 = vld [vmem:[%s237] sm:$0xf]
        %v264 = vld [vmem:[%s246] sm:$0xf]
        %v267 = vunpack.c.l.s4 1983009808
        %v268 = vunpack.c.0.s8 %v267
        %v269 = vlaneseq
        %v270 = vshrl.u32 %v269, 7
        %v271 = vsub.s32 %v268, %v270
        %v272 = vrot.slane %v264, %v271
        %v273 = vcombine.high %v272, %v272
        %vm274 = vcmask 31744
        %v276 = vsel %vm274, %v263, 0
        %vm278 = vcmask 1041408
        %v280 = vsel %vm278, %v272, 0
        %v283 = vsel %vm278, %v273, 0
        %285 = vmatprep.subr.bf16.mxu0 %v283
        %286 = vmatpush1.bf16.msra.mxu0 %v280
        %287 = vmatprep.subr.bf16.mxu0 0
        %288 = vmatpush1.bf16.msra.mxu0 0
        %289 = vmatprep.subr.bf16.mxu0 0
        %290 = vmatpush1.bf16.msra.mxu0 0
        %291 = vmatprep.subr.bf16.mxu0 0
        %292 = vmatpush1.bf16.msra.mxu0 0
        %293 = vmatprep.subr.bf16.mxu0 0
        %294 = vmatpush1.bf16.msra.mxu0 0
        %295 = vmatprep.subr.bf16.mxu0 0
        %296 = vmatpush1.bf16.msra.mxu0 0
        %297 = vmatprep.subr.bf16.mxu0 0
        %298 = vmatpush1.bf16.msra.mxu0 0
        %299 = vmatprep.subr.bf16.mxu0 0
        %300 = vmatpush1.bf16.msra.mxu0 0
        %301 = vmatprep.subr.bf16.mxu0 0
        %302 = vmatpush1.bf16.msra.mxu0 0
        %303 = vmatprep.subr.bf16.mxu0 0
        %304 = vmatpush1.bf16.msra.mxu0 0
        %305 = vmatprep.subr.bf16.mxu0 0
        %306 = vmatpush1.bf16.msra.mxu0 0
        %307 = vmatprep.subr.bf16.mxu0 0
        %308 = vmatpush1.bf16.msra.mxu0 0
        %309 = vmatprep.subr.bf16.mxu0 0
        %310 = vmatpush1.bf16.msra.mxu0 0
        %311 = vmatprep.subr.bf16.mxu0 0
        %312 = vmatpush1.bf16.msra.mxu0 0
        %313 = vmatprep.subr.bf16.mxu0 0
        %314 = vmatpush1.bf16.msra.mxu0 0
        %315 = vmatprep.subr.bf16.mxu0 0
        %316 = vmatpush1.bf16.msra.mxu0 0
        %317 = vmatprep.mubr.bf16.mxu0 0
        %318 = vmatmul.mubr.bf16.gmra.mrb[0].mxu0 %v276
        %v319 = vpop.f32.mrb[0].mxu0
        %v320 = vadd.f32 0.0, %v319
        %v321 = vpop.f32.mrb[0].mxu0
        %v322 = vadd.f32 0.0, %v321
        %v323 = vpop.f32.mrb[0].mxu0
        %v324 = vpop.f32.mrb[0].mxu0
        %325 = vdwg.mxu0
        %v326 = vadd.f32 %v261, %v320
        %v327 = vadd.f32 %v262, %v322
        %328 = vst [vmem:[#allocation2] sm:$0xff] %v326
        %329 = vst [vmem:[#allocation2 + $0x8] sm:$0xff] %v327
        // Predicated region
        $region37: #{tpu_custom_call.1} parent=31 // pred_check
          %p330 = pneg %p255
        $region38: #{tpu_custom_call.1} parent=31 // pred_check_branch
          %332 = sbr.rel (%p330) target = $region40
        $region39: #{tpu_custom_call.1} parent=31 // pred_region
          %v333 = vld [vmem:[#allocation2] sm:$0xff]
          %v334 = vld [vmem:[#allocation2 + $0x8] sm:$0xff]
          %v335 = vld [vmem:[%s251] sm:$0x3]
          %v337 = vlaneseq
          %v338 = vshrl.u32 %v337, 7
          %v339 = vsub.s32 0, %v338
          %v340 = vrot.slane %v335, %v339
          %v341 = vlaneseq
          %v342 = vshrl.u32 %v341, 7
          %v343 = vsub.s32 1, %v342
          %v344 = vrot.slane %v335, %v343
          %v347 = vadd.f32 %v333, %v340
          %v348 = vadd.f32 %v334, %v344
          %v349 = vpack.c.bf16 %v347, %v347
          %v350 = vpack.c.bf16 %v348, %v348
          %v353 = vunpack.c.l.b16 %v349
          %v354 = vunpack.c.l.b16 %v350
          %v355 = vpack.c.b16 %v354, %v353
          %357 = vst [vmem:[%s230] sm:$0xff] %v355
        $region40: #{tpu_custom_call.1} parent=31 // pred_fallthru
          _
        %s358 = sand.u32 %s128, 1
        %s359 = scalar_lea.sflag [#allocation4], %s358
        %s360 = sand.u32 %s128, 1
        %s361 = smul.addr %s360, 8
        %s362 = scalar_lea.vmem [#allocation3], %s361
        // Predicated region
        $region41: #{tpu_custom_call.1} parent=31 // pred_check
          %p363 = pneg %p138
        $region42: #{tpu_custom_call.1} parent=31 // pred_check_branch
          %365 = sbr.rel (%p363) target = $region44
        $region43: #{tpu_custom_call.1} parent=31 // pred_region
          %s366 = smul.u32 2, %s23
          %s368 = ssub.s32 128, 128
          %369 = vsyncadd %s359, %s368
          %s370 = smul.addr %s22, 2
          %s371 = sadd.s32 %s366, %s370
          %s372 = smul.addr %s371, 64
          %s373 = scalar_lea.hbm %s3, %s372
          %s375 = sshll.u32 %s362, 4
          %s376 = int_to_ptr.vmem [resolvable:$true] %s375
          %378 = dma.vmem_to_hbm [thread:$0]  %s376, 128, %s373, %s359
        $region44: #{tpu_custom_call.1} parent=31 // pred_fallthru
          _
      $region32: #{tpu_custom_call.1} parent=5 // pred_fallthru
        _
      %p379 = scmp.le.s32.totalorder 2, %s12
      // Predicated region
      $region45: #{tpu_custom_call.1} parent=5 // pred_check
        %p380 = pneg %p379
      $region46: #{tpu_custom_call.1} parent=5 // pred_check_branch
        %382 = sbr.rel (%p380) target = $region48
      $region47: #{tpu_custom_call.1} parent=5 // pred_region
        %s383 = ssub.s32 %s12, 2
        // Predicated region
        $region49: #{tpu_custom_call.1} parent=47 // pred_check
          %p384 = pneg %p144
        $region50: #{tpu_custom_call.1} parent=47 // pred_check_branch
          %386 = sbr.rel (%p384) target = $region52
        $region51: #{tpu_custom_call.1} parent=47 // pred_region
          %s387 = sand.u32 %s129, 1
          %s388 = scalar_lea.sflag [#allocation4], %s387
          %s389 = sand.u32 %s129, 1
          %s390 = smul.addr %s389, 8
          %s391 = scalar_lea.vmem [#allocation3], %s390
          %392 = dma.done %s388, 128
        $region52: #{tpu_custom_call.1} parent=47 // pred_fallthru
          _
      $region48: #{tpu_custom_call.1} parent=5 // pred_fallthru
        _
    $region6: #{tpu_custom_call.1} parent=1 // loop_footer
      %s16 = sadd.s32 1, %s12
    $region7: #{tpu_custom_call.1} parent=1 // loop_footer_branch
      %11 = sbr.rel target = $region3
    $region8: #{tpu_custom_call.1} parent=1 // loop_exit
      _
    %393 = vsyncpa [#allocation4], 1
    %s394 = scalar_lea.sflag [#allocation4], 1
    %395 = vsyncpa %s394, 1

</llo_original>
